<compile_context>
chip_gen: v5e
topology: v5e:2x2
jax: 0.10.0
libtpu: 0.0.40
codegen_flags: <defaults>
</compile_context>

<pallas_src>
import functools

import jax
import jax.numpy as jnp
from jax import lax
from jax.experimental import pallas as pl
from jax.experimental.pallas import tpu as pltpu

_EPS = 1e-6  # matches torch F.pairwise_distance default eps


def _contrastive_loss_kernel(e1_ref, e2_ref, lab_ref, out_ref, *,
                             margin, batch, tile_rows, tiles_per_chunk,
                             mask_rows, labels_resident):
    c = pl.program_id(0)          # chunk axis (sharded across TCs on v7x)
    i = pl.program_id(1)          # reduction axis over row tiles (arbitrary)
    tile_idx = c * tiles_per_chunk + i

    @pl.when(i == 0)
    def _():
        out_ref[...] = jnp.zeros_like(out_ref)

    e1 = e1_ref[...].astype(jnp.float32)
    e2 = e2_ref[...].astype(jnp.float32)
    diff = e1 - e2 + _EPS                                   # pairwise_distance eps

    if mask_rows:
        rows = (lax.broadcasted_iota(jnp.int32, (tile_rows, 1), 0)
                + tile_idx * tile_rows)
        valid = rows < batch                                # (TB, 1)
        # Zero padded / duplicated rows BEFORE the reduction so no garbage
        # flows through sqrt (also keeps the kernel safe to differentiate).
        diff = jnp.where(valid, diff, 0.0)

    # D-reduction on the (otherwise idle) MXU instead of an XLU lane-sum.
    ones = jnp.ones((diff.shape[-1], 1), dtype=jnp.float32)
    sq_dist = jnp.dot(diff * diff, ones,
                      preferred_element_type=jnp.float32)   # (TB, 1) == d**2
    dist = jnp.sqrt(sq_dist)                                # EUP
    hinge = jnp.maximum(margin - dist, 0.0)
    neg = hinge * hinge

    if labels_resident:
        start = pl.multiple_of(tile_idx * tile_rows, tile_rows)
        labels = lab_ref[pl.ds(start, tile_rows), :]        # slice resident block
    else:
        labels = lab_ref[...]                               # per-tile block

    # Labels are binary {0, 1} (module contract) -> fused narrow-column select.
    per_row = jnp.where(labels > 0.5, sq_dist, neg)
    if mask_rows:
        per_row = jnp.where(valid, per_row, 0.0)

    # Accumulate the tile partial sum directly in the resident output block.
    out_ref[...] += jnp.sum(per_row)


def _tpu_generation_params():
    """Returns (tile_budget_bytes, vmem_limit_ceiling_bytes, multi_core)."""
    vmem = 128 << 20
    kind = ""
    try:
        vmem = int(pltpu.get_tpu_info().vmem_capacity_bytes)
    except Exception:
        pass
    try:
        kind = jax.devices()[0].device_kind.lower()
    except Exception:
        pass
    if vmem <= (64 << 20) or "v7" in kind:
        # v7x-style part: 64 MiB VMEM per TensorCore, 2 TensorCores per chip.
        return 20 << 20, 44 << 20, True
    # v5e / v6e: 128 MiB VMEM, single TensorCore.
    return 48 << 20, 100 << 20, False


def _choose_tile_rows(batch, dim, dim_padded, itemsize, tile_budget_bytes):
    """Row tile sized by bytes/step: aim for ~4 MiB of combined embedding
    traffic per grid step (per-step ~0.35us overhead becomes negligible),
    capped by the double-buffered VMEM footprint budget."""
    align = 8 if itemsize >= 4 else (16 if itemsize == 2 else 32)
    target_rows = max(align, (4 << 20) // max(1, 2 * dim * itemsize))
    cap_rows = max(align, tile_budget_bytes // max(1, 4 * dim_padded * itemsize))
    tb = min(target_rows, cap_rows)
    if batch <= tb:
        return int(batch)           # single full-rows tile (full dim block is legal)
    return int(max(align, (tb // align) * align))


def contrastive_loss(embedding1, embedding2, labels, margin: float = 1.0,
                     tile_rows: int | None = None,
                     resident_labels: bool | None = None):
    """embedding1, embedding2: (B, D); labels: (B,) binary {0, 1}."""
    B, D = embedding1.shape
    itemsize = jnp.dtype(embedding1.dtype).itemsize
    align = 8 if itemsize >= 4 else (16 if itemsize == 2 else 32)
    d_pad = -(-D // 128) * 128      # lane-padded minor dim (VMEM footprint)

    tile_budget, vmem_ceiling, multi_core = _tpu_generation_params()

    if tile_rows is not None:
        TB = int(tile_rows)
        if TB >= B:
            TB = B
        elif TB % align:
            TB = max(align, (TB // align) * align)   # keep BlockSpec (8,128)-legal
    else:
        TB = _choose_tile_rows(B, D, d_pad, itemsize, tile_budget)
    # TODO(synk): for extremely large D (a (TB, D) tile no longer fits VMEM),
    # add a second 'arbitrary' grid axis over D-chunks with a (TB, 1) scratch.

    num_tiles = pl.cdiv(B, TB)
    num_chunks = min(2, num_tiles) if multi_core else 1   # split rows across TCs only on v7x
    tiles_per_chunk = pl.cdiv(num_tiles, num_chunks)
    last_tile = num_tiles - 1
    covered = num_chunks * tiles_per_chunk * TB
    mask_rows = covered != B

    def row_block(c, i):
        # Clamp so extra tiles from the chunk split never index past the array;
        # their contribution is zeroed by the in-kernel row mask.
        return (jnp.minimum(c * tiles_per_chunk + i, last_tile), 0)

    labels_col = labels.reshape(B, 1).astype(jnp.float32)
    if resident_labels is None:
        labels_resident = covered <= 8192       # resident column <= ~4 MiB of VMEM
    else:
        labels_resident = bool(resident_labels)

    if labels_resident:
        if covered > B:
            labels_col = jnp.pad(labels_col, ((0, covered - B), (0, 0)))
        lab_spec = pl.BlockSpec((covered, 1), lambda c, i: (0, 0))  # load once
        lab_vmem = 2 * covered * 128 * 4
    else:
        lab_spec = pl.BlockSpec((TB, 1), row_block)
        lab_vmem = 2 * 2 * TB * 128 * 4

    # Explicit scoped-VMEM limit: embeddings double-buffered + labels + slack,
    # capped per generation (leave headroom for Mosaic internal scratch).
    emb_tile_bytes = TB * d_pad * itemsize
    need = 4 * emb_tile_bytes + lab_vmem + (4 << 20)
    vmem_limit = int(min(max(need, 24 << 20), vmem_ceiling))

    kernel = functools.partial(
        _contrastive_loss_kernel,
        margin=float(margin), batch=B, tile_rows=TB,
        tiles_per_chunk=tiles_per_chunk, mask_rows=mask_rows,
        labels_resident=labels_resident)

    def run(dim_sems):
        return pl.pallas_call(
            kernel,
            out_shape=jax.ShapeDtypeStruct((num_chunks, 8, 128), jnp.float32),
            grid_spec=pltpu.PrefetchScalarGridSpec(
                num_scalar_prefetch=0,
                grid=(num_chunks, tiles_per_chunk),
                in_specs=[
                    pl.BlockSpec((TB, D), row_block),
                    pl.BlockSpec((TB, D), row_block),
                    lab_spec,
                ],
                out_specs=pl.BlockSpec((1, 8, 128), lambda c, i: (c, 0, 0)),
            ),
            compiler_params=pltpu.CompilerParams(
                dimension_semantics=dim_sems,
                vmem_limit_bytes=vmem_limit),
        )(embedding1, embedding2, labels_col)

    if num_chunks > 1:
        # v7x path: ask for the chunk axis to shard across the 2 TensorCores.
        try:
            partials = jax.block_until_ready(
                run((pltpu.CORE_PARALLEL, pltpu.ARBITRARY)))
        except Exception:
            # TODO(synk): verify CORE_PARALLEL sharding on the target runtime;
            # plain PARALLEL is the documented megacore fallback.
            partials = run((pltpu.PARALLEL, pltpu.ARBITRARY))
    else:
        partials = run((pltpu.ARBITRARY, pltpu.ARBITRARY))

    # Divide by B exactly once, after summing the per-chunk partial sums.
    return jnp.sum(partials[:, 0, 0]) / B


def _reference_loss(e1, e2, labels, margin=1.0):
    # Pure-JAX reference mirroring the PyTorch module (sanity check).
    d = jnp.sqrt(jnp.sum((e1 - e2 + _EPS) ** 2, axis=-1))
    pos = labels * d ** 2
    neg = (1.0 - labels) * jnp.maximum(margin - d, 0.0) ** 2
    return jnp.mean(pos + neg)


if __name__ == "__main__":
    key = jax.random.PRNGKey(0)
    ks = jax.random.split(key, 9)

    # Test 1: small single-tile path (B=8, D=32), resident labels, no masking.
    B, D = 8, 32
    e1 = jax.random.normal(ks[0], (B, D), dtype=jnp.float32)
    e2 = jax.random.normal(ks[1], (B, D), dtype=jnp.float32)
    lab = jax.random.bernoulli(ks[2], 0.5, (B,)).astype(jnp.float32)
    out = jax.block_until_ready(contrastive_loss(e1, e2, lab, margin=1.0))
    ref = _reference_loss(e1, e2, lab, margin=1.0)
    assert jnp.allclose(out, ref, rtol=1e-5, atol=1e-5), (out, ref)

    # Test 2: multi-tile accumulation path (exact tiling, forced small tile).
    B2, D2 = 48, 128
    e1b = jax.random.normal(ks[3], (B2, D2), dtype=jnp.float32)
    e2b = jax.random.normal(ks[4], (B2, D2), dtype=jnp.float32)
    labb = jax.random.bernoulli(ks[5], 0.5, (B2,)).astype(jnp.float32)
    out2 = jax.block_until_ready(
        contrastive_loss(e1b, e2b, labb, margin=1.0, tile_rows=16))
    ref2 = _reference_loss(e1b, e2b, labb, margin=1.0)
    assert jnp.allclose(out2, ref2, rtol=1e-5, atol=1e-5), (out2, ref2)

    # Test 3: ragged batch (masked tail) + per-tile (non-resident) labels path.
    B3, D3 = 30, 64
    e1c = jax.random.normal(ks[6], (B3, D3), dtype=jnp.float32)
    e2c = jax.random.normal(ks[7], (B3, D3), dtype=jnp.float32)
    labc = jax.random.bernoulli(ks[8], 0.5, (B3,)).astype(jnp.float32)
    out3 = jax.block_until_ready(
        contrastive_loss(e1c, e2c, labc, margin=1.0, tile_rows=8,
                         resident_labels=False))
    ref3 = _reference_loss(e1c, e2c, labc, margin=1.0)
    assert jnp.allclose(out3, ref3, rtol=1e-5, atol=1e-5), (out3, ref3)

    print("KERNEL_OK")
</pallas_src>

<mosaic_0001>
module attributes {stable_mosaic.version = 11 : i64} {
  func.func @_contrastive_loss_kernel(%arg0: i32, %arg1: i32, %arg2: memref<8x32xf32, #tpu.memory_space<vmem>>, %arg3: memref<8x32xf32, #tpu.memory_space<vmem>>, %arg4: memref<8x1xf32, #tpu.memory_space<vmem>>, %arg5: memref<1x8x128xf32, #tpu.memory_space<vmem>>) attributes {dimension_semantics = [#tpu.dimension_semantics<arbitrary>, #tpu.dimension_semantics<arbitrary>], iteration_bounds = array<i64: 1, 1>, scalar_prefetch = 0 : i64, scratch_operands = 0 : i64, tpu.core_type = #tpu.core_type<tc>, window_params = [{transform_indices = @transform_0, window_bounds = array<i64: 8, 32>}, {transform_indices = @transform_1, window_bounds = array<i64: 8, 32>}, {pipeline_mode = #tpu.pipeline_mode<synchronous>, transform_indices = @transform_2, window_bounds = array<i64: 8, 1>}, {transform_indices = @transform_3, window_bounds = array<i64: 1, 8, 128>}]} {
    %c1_i32 = arith.constant 1 : i32
    %0 = arith.muli %arg0, %c1_i32 : i32
    %1 = arith.addi %0, %arg1 : i32
    %c0_i32 = arith.constant 0 : i32
    %2 = arith.cmpi eq, %arg1, %c0_i32 : i32
    %3 = arith.extui %2 : i1 to i32
    %c0_i32_0 = arith.constant 0 : i32
    %4 = arith.cmpi ne, %3, %c0_i32_0 : i32
    scf.if %4 {
      %cst_17 = arith.constant 0.000000e+00 : f32
      %34 = vector.broadcast %cst_17 : f32 to vector<1x8x128xf32>
      %c0_18 = arith.constant 0 : index
      %c0_19 = arith.constant 0 : index
      %c0_20 = arith.constant 0 : index
      %35 = vector.load %arg5[%c0_18, %c0_19, %c0_20] : memref<1x8x128xf32, #tpu.memory_space<vmem>>, vector<1x8x128xf32>
      tpu.vector_store %arg5[%c0_18, %c0_19, %c0_20], %34 {strides = array<i32>} : memref<1x8x128xf32, #tpu.memory_space<vmem>>, vector<1x8x128xf32>,
    } else {
    }
    %c0 = arith.constant 0 : index
    %c0_1 = arith.constant 0 : index
    %5 = vector.load %arg2[%c0, %c0_1] : memref<8x32xf32, #tpu.memory_space<vmem>>, vector<8x32xf32>
    %c0_2 = arith.constant 0 : index
    %c0_3 = arith.constant 0 : index
    %6 = vector.load %arg3[%c0_2, %c0_3] : memref<8x32xf32, #tpu.memory_space<vmem>>, vector<8x32xf32>
    %7 = arith.subf %5, %6 : vector<8x32xf32>
    %cst = arith.constant 9.99999997E-7 : f32
    %8 = vector.broadcast %cst : f32 to vector<8x32xf32>
    %9 = arith.addf %7, %8 : vector<8x32xf32>
    %cst_4 = arith.constant 1.000000e+00 : f32
    %10 = vector.broadcast %cst_4 : f32 to vector<32x1xf32>
    %11 = arith.mulf %9, %9 : vector<8x32xf32>
    %cst_5 = arith.constant dense<0.000000e+00> : vector<8x1xf32>
    %12 = tpu.matmul %11, %10, %cst_5 {dimension_numbers = #tpu.dot_dimension_numbers<[1], [0], [0], [1], [0, 0, 1, 1], [], []>} : vector<8x32xf32>, vector<32x1xf32>, vector<8x1xf32> -> vector<8x1xf32>
    %13 = math.sqrt %12 : vector<8x1xf32>
    %cst_6 = arith.constant 1.000000e+00 : f32
    %14 = vector.broadcast %cst_6 : f32 to vector<8x1xf32>
    %15 = arith.subf %14, %13 : vector<8x1xf32>
    %cst_7 = arith.constant 0.000000e+00 : f32
    %16 = vector.broadcast %cst_7 : f32 to vector<8x1xf32>
    %17 = arith.maximumf %15, %16 : vector<8x1xf32>
    %18 = arith.mulf %17, %17 : vector<8x1xf32>
    %c8_i32 = arith.constant 8 : i32
    %19 = arith.muli %1, %c8_i32 : i32
    %20 = tpu.assume_multiple %19, 8 : i32
    %21 = arith.index_cast %20 : i32 to index
    %c0_8 = arith.constant 0 : index
    %22 = vector.load %arg4[%21, %c0_8] : memref<8x1xf32, #tpu.memory_space<vmem>>, vector<8x1xf32>
    %cst_9 = arith.constant 5.000000e-01 : f32
    %23 = vector.broadcast %cst_9 : f32 to vector<8x1xf32>
    %24 = arith.cmpf ogt, %22, %23 : vector<8x1xf32>
    %25 = arith.select %24, %12, %18 : vector<8x1xi1>, vector<8x1xf32>
    %c0_10 = arith.constant 0 : index
    %c0_11 = arith.constant 0 : index
    %c0_12 = arith.constant 0 : index
    %26 = vector.load %arg5[%c0_10, %c0_11, %c0_12] : memref<1x8x128xf32, #tpu.memory_space<vmem>>, vector<1x8x128xf32>
    %27 = vector.shape_cast %25 : vector<8x1xf32> to vector<1x8x1xf32>
    %cst_13 = arith.constant dense<0.000000e+00> : vector<1xf32>
    %28 = vector.multi_reduction <add>, %27, %cst_13 [1, 2] : vector<1x8x1xf32> to vector<1xf32>
    %29 = vector.shape_cast %28 : vector<1xf32> to vector<1x1x1xf32>
    %30 = vector.extract %29[0, 0, 0] : f32 from vector<1x1x1xf32>
    %31 = vector.broadcast %30 : f32 to vector<1x8x128xf32>
    %32 = arith.addf %26, %31 : vector<1x8x128xf32>
    %c0_14 = arith.constant 0 : index
    %c0_15 = arith.constant 0 : index
    %c0_16 = arith.constant 0 : index
    %33 = vector.load %arg5[%c0_14, %c0_15, %c0_16] : memref<1x8x128xf32, #tpu.memory_space<vmem>>, vector<1x8x128xf32>
    tpu.vector_store %arg5[%c0_14, %c0_15, %c0_16], %32 {strides = array<i32>} : memref<1x8x128xf32, #tpu.memory_space<vmem>>, vector<1x8x128xf32>,
    return
  }
  func.func @transform_0(%arg0: i32, %arg1: i32) -> (i32, i32) {
    %c1_i32 = arith.constant 1 : i32
    %0 = arith.muli %arg0, %c1_i32 : i32
    %1 = arith.addi %0, %arg1 : i32
    %c0_i32 = arith.constant 0 : i32
    %2 = arith.minsi %1, %c0_i32 : i32
    %c0_i32_0 = arith.constant 0 : i32
    %c0_i32_1 = arith.constant 0 : i32
    return %2, %c0_i32_0 : i32, i32
  }
  func.func @transform_1(%arg0: i32, %arg1: i32) -> (i32, i32) {
    %c1_i32 = arith.constant 1 : i32
    %0 = arith.muli %arg0, %c1_i32 : i32
    %1 = arith.addi %0, %arg1 : i32
    %c0_i32 = arith.constant 0 : i32
    %2 = arith.minsi %1, %c0_i32 : i32
    %c0_i32_0 = arith.constant 0 : i32
    %c0_i32_1 = arith.constant 0 : i32
    return %2, %c0_i32_0 : i32, i32
  }
  func.func @transform_2(%arg0: i32, %arg1: i32) -> (i32, i32) {
    %c0_i32 = arith.constant 0 : i32
    %c0_i32_0 = arith.constant 0 : i32
    %c0_i32_1 = arith.constant 0 : i32
    return %c0_i32, %c0_i32_0 : i32, i32
  }
  func.func @transform_3(%arg0: i32, %arg1: i32) -> (i32, i32, i32) {
    %c0_i32 = arith.constant 0 : i32
    %c0_i32_0 = arith.constant 0 : i32
    %c0_i32_1 = arith.constant 0 : i32
    return %arg0, %c0_i32, %c0_i32_0 : i32, i32, i32
  }
}

</mosaic_0001>

<llo_original>
// kernel: tpu_custom_call.1
$region0: #{tpu_custom_call.1}
  #allocation0 [shape = 'u32[]', space=smem, size = 0x4, offset = 0x4, fixed_abs, tag = 'smem constant byte address 0x4 - core index']
  #allocation1 [shape = 'u32[72,128]{1,0:T(1,128)}', space=vmem, size = 0x9000, scoped, tag = 'internal scratch']
  %s0 = inlined_call_operand.vmem [shape: f32[8,32], index: 0, kind: input, shape index: {}]
  %s1 = inlined_call_operand.hbm [shape: f32[8,32], index: 1, kind: input, shape index: {}]
  %s2 = inlined_call_operand.vmem [shape: f32[8,1], index: 2, kind: input, shape index: {}]
  %s3 = inlined_call_operand.hbm [shape: f32[1,8,128], index: 3, kind: output, shape index: {}]
  %s4 = sld [smem:[#allocation0]]
  $region30: #{tpu_custom_call.1} parent=0
    _
  %s6 = ssub.s32 1, %s4
  %s7 = scalar_select 0, %s6, %s4
  $region1: #{tpu_custom_call.1} parent=0
    #allocation2 [shape = 'u8[4096]{0}', space=vmem, size = 0x1000, scoped, tag = 'input window, operand 1, single buffered']
    #allocation3 [shape = 's32[1]{0}', space=sflag, size = 0x4, scoped, tag = 'scoped memory for tpu_custom_call.1']
    #allocation4 [shape = 's32[1]{0}', space=sflag, size = 0x4, scoped, tag = 'scoped memory for tpu_custom_call.1']
    #allocation5 [shape = 'u8[4096]{0}', space=vmem, size = 0x1000, scoped, tag = 'output window, operand 0, single buffered']
    %8 = vsyncpa [#allocation3], 0
    %9 = vsyncpa [#allocation4], 0
    // Predicated region
    $region2: #{tpu_custom_call.1} parent=1 // pred_check
      _
    $region3: #{tpu_custom_call.1} parent=1 // pred_check_branch
      %11 = sbr.rel (0) target = $region5
    $region4: #{tpu_custom_call.1} parent=1 // pred_region
      %s12 = sadd.s32 0, 0
      %p13 = scmp.lt.s32.totalorder %s12, 0
      %s14 = scalar_select %p13, %s12, 0
      %p15 = scmp.lt.s32.totalorder %s14, 0
      %s16 = scalar_select %p15, %s14, 0
      %s17 = smul.addr %s16, 8
      %s18 = scalar_lea.vmem %s0, %s17
      %s19 = sadd.s32 0, 0
      %p20 = scmp.lt.s32.totalorder %s19, 0
      %s21 = scalar_select %p20, %s19, 0
    $region5: #{tpu_custom_call.1} parent=1 // pred_fallthru
      _
    // Predicated region
    $region6: #{tpu_custom_call.1} parent=1 // pred_check
      _
    $region7: #{tpu_custom_call.1} parent=1 // pred_check_branch
      %23 = sbr.rel (0) target = $region9
    $region8: #{tpu_custom_call.1} parent=1 // pred_region
      %s24 = sadd.s32 0, 0
      %p25 = scmp.lt.s32.totalorder %s24, 0
      %s26 = scalar_select %p25, %s24, 0
      %28 = vsyncadd [#allocation3], 0
      %s29 = smul.addr %s26, 8
      %s30 = scalar_lea.hbm %s1, %s29
      %s32 = sshll.u32 %s30, 4
      %s33 = int_to_ptr.hbm [resolvable:$true] %s32
      %s34 = sshll.u32 [#allocation2], 4
      %s35 = int_to_ptr.vmem [resolvable:$true] %s34
      %37 = dma.hbm_to_vmem [thread:$0]  %s33, 128, %s35, [#allocation3]
    $region9: #{tpu_custom_call.1} parent=1 // pred_fallthru
      _
    // Predicated region
    $region10: #{tpu_custom_call.1} parent=1 // pred_check
      _
    $region11: #{tpu_custom_call.1} parent=1 // pred_check_branch
      %39 = sbr.rel (0) target = $region13
    $region12: #{tpu_custom_call.1} parent=1 // pred_region
      _
    $region13: #{tpu_custom_call.1} parent=1 // pred_fallthru
      _
    // Predicated region
    $region14: #{tpu_custom_call.1} parent=1 // pred_check
      _
    $region15: #{tpu_custom_call.1} parent=1 // pred_check_branch
      %41 = sbr.rel (0) target = $region17
    $region16: #{tpu_custom_call.1} parent=1 // pred_region
      %43 = dma.done [#allocation3], 128
    $region17: #{tpu_custom_call.1} parent=1 // pred_fallthru
      _
    %s44 = sadd.s32 0, 0
    %p45 = scmp.lt.s32.totalorder %s44, 0
    %s46 = scalar_select %p45, %s44, 0
    %p47 = scmp.lt.s32.totalorder %s46, 0
    %s48 = scalar_select %p47, %s46, 0
    %s49 = smul.addr %s48, 8
    %s50 = scalar_lea.vmem %s0, %s49
    %s51 = sadd.s32 0, 0
    %p52 = scmp.lt.s32.totalorder %s51, 0
    %s53 = scalar_select %p52, %s51, 0
    %p54 = scmp.lt.s32.totalorder %s53, 0
    %s55 = scalar_select %p54, %s53, 0
    %s56 = smul.addr %s55, 8
    %s57 = scalar_lea.vmem %s0, %s56
    %s58 = sadd.s32 0, 0
    %p59 = scmp.lt.s32.totalorder %s58, 0
    %s60 = scalar_select %p59, %s58, 0
    %s61 = sadd.s32 0, 0
    %p62 = scmp.lt.s32.totalorder %s61, 0
    %s63 = scalar_select %p62, %s61, 0
    %s64 = sadd.s32 0, 0
    %p65 = scmp.eq.s32.totalorder 0, 0
    // Predicated region
    $region18: #{tpu_custom_call.1} parent=1 // pred_check
      %p66 = pneg %p65
    $region19: #{tpu_custom_call.1} parent=1 // pred_check_branch
      %68 = sbr.rel (%p66) target = $region21
    $region20: #{tpu_custom_call.1} parent=1 // pred_region
      %69 = vst [vmem:[#allocation5] sm:$0xff] 0.0
    $region21: #{tpu_custom_call.1} parent=1 // pred_fallthru
      _
    %v70 = vld [vmem:[%s57] sm:$0xff]
    %v71 = vld [vmem:[#allocation2] sm:$0xff]
    %v72 = vsub.f32 %v70, %v71
    %v73 = vadd.f32 %v72, 1e-06
    %v74 = vmul.f32 %v73, %v73
    %vm75 = vcmask 261120
    %v77 = vsel %vm75, %v74, 0
    %79 = vmatpush.msra.mxu0 0.0
    %80 = vmatpush.msra.mxu0 0.0
    %81 = vmatpush.msra.mxu0 0.0
    %82 = vmatpush.msra.mxu0 0.0
    %83 = vmatpush.msra.mxu0 0.0
    %84 = vmatpush.msra.mxu0 0.0
    %85 = vmatpush.msra.mxu0 0.0
    %86 = vmatpush.msra.mxu0 0.0
    %87 = vmatpush.msra.mxu0 0.0
    %88 = vmatpush.msra.mxu0 0.0
    %89 = vmatpush.msra.mxu0 0.0
    %90 = vmatpush.msra.mxu0 0.0
    %91 = vmatpush.msra.mxu0 1.0
    %92 = vmatpush.msra.mxu0 1.0
    %93 = vmatpush.msra.mxu0 1.0
    %94 = vmatpush.msra.mxu0 1.0
    %95 = vmatmul.f32.gmra.mxu0 %v77
    %v96 = vpop.f32.mrf.mxu0
    %v97 = vadd.f32 0.0, %v96
    %98 = vdwg.mxu0
    %v99 = vrsqrt.pop %v97
    %v100 = vmul.f32 %v99, %v97
    %v101 = vmul.f32 %v100, %v99
    %v102 = vmul.f32 0.5, %v101
    %v103 = vsub.f32 1.5, %v102
    %v104 = vmul.f32 %v99, %v103
    %v105 = vmul.f32 %v97, %v104
    %vm106 = vcmp.eq.f32.partialorder %v97, inf
    %v107 = vsel %vm106, %v97, %v105
    %vm108 = vcmp.eq.f32.partialorder %v97, 0.0
    %v109 = vand.u32 %v97, 2147483648
    %v110 = vsel %vm108, %v109, %v107
    %v111 = vsub.f32 1.0, %v110
    %v112 = vmax.f32 %v111, 0.0
    %v113 = vmul.f32 %v112, %v112
    %s114 = smul.u32 %s64, 8
    %s115 = scalar_lea.vmem %s2, %s114
    %v116 = vld [vmem:[%s115] sm:$0xff]
    %vm117 = vcmp.gt.f32.partialorder %v116, 0.5
    %v118 = vsel %vm117, %v97, %v113
    %v119 = vld [vmem:[#allocation5] sm:$0xff]
    %vm120 = vcmask 7168
    %v121 = vsel %vm120, %v118, 0.0
    %122 = vadd.xlane.f32.xlu0 %v121
    %v123 = vpop.xlane.xlu0 %122
    %v124 = vrot.slane %v123, 4
    %v125 = vadd.f32 %v123, %v124
    %v126 = vrot.slane %v125, 2
    %v127 = vadd.f32 %v125, %v126
    %v128 = vrot.slane %v127, 1
    %v129 = vadd.f32 %v127, %v128
    %s130 = vtos %v129
    %v131 = vstv %s130
    %v132 = vadd.f32 %v119, %v131
    %133 = vst [vmem:[#allocation5] sm:$0xff] %v132
    // Predicated region
    $region22: #{tpu_custom_call.1} parent=1 // pred_check
      _
    $region23: #{tpu_custom_call.1} parent=1 // pred_check_branch
      %135 = sbr.rel (0) target = $region25
    $region24: #{tpu_custom_call.1} parent=1 // pred_region
      %137 = vsyncadd [#allocation4], 0
      %s139 = sshll.u32 [#allocation5], 4
      %s140 = int_to_ptr.vmem [resolvable:$true] %s139
      %s141 = sshll.u32 %s3, 4
      %s142 = int_to_ptr.hbm [resolvable:$true] %s141
      %144 = dma.vmem_to_hbm [thread:$0]  %s140, 128, %s142, [#allocation4]
    $region25: #{tpu_custom_call.1} parent=1 // pred_fallthru
      _
    // Predicated region
    $region26: #{tpu_custom_call.1} parent=1 // pred_check
      _
    $region27: #{tpu_custom_call.1} parent=1 // pred_check_branch
      %146 = sbr.rel (0) target = $region29
    $region28: #{tpu_custom_call.1} parent=1 // pred_region
      %148 = dma.done [#allocation4], 128
    $region29: #{tpu_custom_call.1} parent=1 // pred_fallthru
      _
    %149 = vsyncpa [#allocation3], 1
    %150 = vsyncpa [#allocation4], 1

</llo_original>
